<compile_context>
chip_gen: v5e
topology: v5e:2x2
jax: 0.10.0
libtpu: 0.0.40
codegen_flags: <defaults>
</compile_context>

<pallas_src>
import jax
import jax.numpy as jnp
from jax.experimental import pallas as pl
from jax.experimental.pallas import tpu as pltpu


def _scalar_mul_kernel(s_ref, a_ref, o_ref):
    # s_ref: (1,) scalar in SMEM; a_ref / o_ref: (tm, L) VMEM tiles.
    o_ref[...] = a_ref[...] * s_ref[0]


def _sublane_pack(elem_bytes: int) -> int:
    # Rows per packed vreg sublane group: f32 -> 8, bf16/f16 -> 16, int8/fp8 -> 32.
    return max(8, 32 // max(1, elem_bytes))


def _vmem_capacity_bytes() -> int:
    try:
        info = pltpu.get_tpu_info()
        cap = getattr(info, "vmem_capacity_bytes", None)
        if cap:
            return int(cap)
    except Exception:
        pass
    return 64 << 20  # conservative default: v7x per-TensorCore VMEM


def _generation_budget():
    """(target_tile_bytes, vmem_limit_cap) chosen from the chip's VMEM size."""
    cap = _vmem_capacity_bytes()
    if cap >= (100 << 20):          # v5e / v6e: 128 MiB VMEM
        return 8 << 20, 80 << 20
    return 4 << 20, 48 << 20        # v7x: 64 MiB per TensorCore


def _choose_lane_dense_shape(M: int, N: int):
    """Pick (rows, L) with L a multiple of 128, same row-major bytes as (M, N).

    Returns None if M*N has no usable factor >= 128 (caller pads instead of
    falling back to a masked-store narrow output).
    """
    total = M * N
    if N % 128 == 0 and N >= 512:
        return M, N
    for L in (4096, 2048, 1024, 512, 256, 128):
        if total % L == 0:
            return total // L, L
    return None


def _choose_row_block(rows: int, L: int, elem_bytes: int, sub: int,
                      target_tile_bytes: int) -> int:
    row_bytes = L * elem_bytes
    slab_bytes = rows * row_bytes
    # Tiny slabs: pipelining can't help; one full block (exempt from (8,128)).
    if slab_bytes <= (2 << 20) or rows < 2 * sub:
        return rows
    # At least 2 grid steps so prefetch/compute/writeback overlap.
    tm = max(sub, min(target_tile_bytes // row_bytes, rows // 2))
    tm = max(sub, (tm // sub) * sub)
    steps = -(-rows // tm)
    if steps > 1 and steps % 2 == 1:
        # Prefer an even step count so the ("parallel",) axis splits evenly
        # across v7x's two TensorCores.
        tm_even = -(-rows // (steps + 1))
        tm_even = max(sub, ((tm_even + sub - 1) // sub) * sub)
        if tm_even < tm:
            tm = tm_even
    return min(tm, rows)


def _launch(a2, s_arr, tm, vmem_limit, alias_input):
    rows, L = a2.shape
    elem_bytes = a2.dtype.itemsize
    grid = (pl.cdiv(rows, tm),)
    cost = pl.CostEstimate(
        flops=rows * L,
        transcendentals=0,
        bytes_accessed=2 * rows * L * elem_bytes,
    )
    extra = {"input_output_aliases": {1: 0}} if alias_input else {}
    return pl.pallas_call(
        _scalar_mul_kernel,
        out_shape=jax.ShapeDtypeStruct((rows, L), a2.dtype),
        grid=grid,
        in_specs=[
            pl.BlockSpec(memory_space=pltpu.SMEM),       # scalar s
            pl.BlockSpec((tm, L), lambda i: (i, 0)),     # full-width row slab of A
        ],
        out_specs=pl.BlockSpec((tm, L), lambda i: (i, 0)),
        compiler_params=pltpu.CompilerParams(
            dimension_semantics=("parallel",),
            vmem_limit_bytes=vmem_limit,
        ),
        cost_estimate=cost,
        **extra,
    )(s_arr, a2)


@jax.jit
def _matrix_scalar_mul_impl(a, s):
    M, N = a.shape
    dtype = a.dtype
    elem_bytes = jnp.dtype(dtype).itemsize
    sub = _sublane_pack(elem_bytes)
    target_tile, limit_cap = _generation_budget()

    s_arr = jnp.asarray(s, dtype=dtype).reshape((1,))
    total = M * N

    shape2 = _choose_lane_dense_shape(M, N)
    if shape2 is not None:
        rows, L = shape2
        a2 = a.reshape(rows, L)           # bitcast-style view: no HBM traffic
        alias = False                     # avoid defensive copy on non-donated input
    else:
        # Irregular N with no factor >= 128: flatten + pad to a lane-dense slab
        # so stores are full-lane vst instead of masked vst.msk.
        if total >= (1 << 22):
            L = 4096
        elif total >= (1 << 18):
            L = 1024
        else:
            L = 512
        unit = L * sub
        padded = -(-total // unit) * unit
        flat = jnp.pad(a.reshape(-1), (0, padded - total))
        rows = padded // L
        a2 = flat.reshape(rows, L)
        alias = True                      # fresh temp: donate it to the output

    tm = _choose_row_block(rows, L, elem_bytes, sub, target_tile)
    tile_bytes = tm * L * elem_bytes
    # 2 arrays (in + out) x 2 buffers x tile, plus headroom for scratch/metadata.
    vmem_limit = int(max(16 << 20, min(4 * tile_bytes + (8 << 20), limit_cap)))

    out2 = _launch(a2, s_arr, tm, vmem_limit, alias)

    if shape2 is not None:
        return out2.reshape(M, N)
    return out2.reshape(-1)[:total].reshape(M, N)


def matrix_scalar_mul(a: jax.Array, s: float) -> jax.Array:
    assert a.ndim == 2, "expected a 2-D matrix"
    return _matrix_scalar_mul_impl(a, s)


if __name__ == "__main__":
    key = jax.random.PRNGKey(0)
    s = 3.14159

    # Clean lane-dense path (N a multiple of 128).
    M, N = 128, 256
    A = jax.random.normal(key, (M, N), dtype=jnp.float32)
    C = jax.block_until_ready(matrix_scalar_mul(A, s))
    ref = A * jnp.float32(s)
    assert C.shape == (M, N) and C.dtype == jnp.float32
    assert jnp.allclose(C, ref, rtol=1e-6, atol=1e-6)

    # Irregular shape exercising the padded lane-dense fallback path.
    M2, N2 = 37, 100
    A2 = jax.random.normal(jax.random.PRNGKey(1), (M2, N2), dtype=jnp.float32)
    C2 = jax.block_until_ready(matrix_scalar_mul(A2, s))
    ref2 = A2 * jnp.float32(s)
    assert C2.shape == (M2, N2)
    assert jnp.allclose(C2, ref2, rtol=1e-6, atol=1e-6)

    print("KERNEL_OK")
</pallas_src>

<mosaic_0001>
module attributes {stable_mosaic.version = 11 : i64} {
  func.func @_scalar_mul_kernel(%arg0: i32, %arg1: memref<1xf32, #tpu.memory_space<smem>>, %arg2: memref<8x4096xf32, #tpu.memory_space<vmem>>, %arg3: memref<8x4096xf32, #tpu.memory_space<vmem>>) attributes {dimension_semantics = [#tpu.dimension_semantics<parallel>], iteration_bounds = array<i64: 1>, scalar_prefetch = 0 : i64, scratch_operands = 0 : i64, tpu.core_type = #tpu.core_type<tc>, window_params = [{transform_indices = @transform_0, window_bounds = array<i64: 1>}, {transform_indices = @transform_1, window_bounds = array<i64: 8, 4096>}, {transform_indices = @transform_2, window_bounds = array<i64: 8, 4096>}]} {
    %c0 = arith.constant 0 : index
    %c0_0 = arith.constant 0 : index
    %0 = vector.load %arg2[%c0, %c0_0] : memref<8x4096xf32, #tpu.memory_space<vmem>>, vector<8x4096xf32>
    %c0_1 = arith.constant 0 : index
    %1 = memref.load %arg1[%c0_1] : memref<1xf32, #tpu.memory_space<smem>>
    %2 = vector.broadcast %1 : f32 to vector<8x4096xf32>
    %3 = arith.mulf %0, %2 : vector<8x4096xf32>
    %c0_2 = arith.constant 0 : index
    %c0_3 = arith.constant 0 : index
    %4 = vector.load %arg3[%c0_2, %c0_3] : memref<8x4096xf32, #tpu.memory_space<vmem>>, vector<8x4096xf32>
    tpu.vector_store %arg3[%c0_2, %c0_3], %3 {strides = array<i32>} : memref<8x4096xf32, #tpu.memory_space<vmem>>, vector<8x4096xf32>,
    return
  }
  func.func @transform_0(%arg0: i32) -> i32 {
    %c0_i32 = arith.constant 0 : i32
    %c0_i32_0 = arith.constant 0 : i32
    return %c0_i32 : i32
  }
  func.func @transform_1(%arg0: i32) -> (i32, i32) {
    %c0_i32 = arith.constant 0 : i32
    %c0_i32_0 = arith.constant 0 : i32
    return %arg0, %c0_i32 : i32, i32
  }
  func.func @transform_2(%arg0: i32) -> (i32, i32) {
    %c0_i32 = arith.constant 0 : i32
    %c0_i32_0 = arith.constant 0 : i32
    return %arg0, %c0_i32 : i32, i32
  }
}

</mosaic_0001>

<llo_original>
// kernel: _matrix_scalar_mul_impl.1
$region0: #{_matrix_scalar_mul_impl.1}
  #allocation0 [shape = 'u32[]', space=smem, size = 0x4, offset = 0x4, fixed_abs, tag = 'smem constant byte address 0x4 - core index']
  #allocation1 [shape = 'u32[72,128]{1,0:T(1,128)}', space=vmem, size = 0x9000, scoped, tag = 'internal scratch']
  #allocation2 [shape = 'f32[1]{0:T(128)S(6)}', space=smem, size = 0x200, scoped, tag = 'scoped memory for _matrix_scalar_mul_impl.1']
  %s0 = inlined_call_operand.<no memory space> [shape: f32[1], index: 0, kind: input, shape index: {}]
  %s1 = inlined_call_operand.vmem [shape: f32[8,4096], index: 1, kind: input, shape index: {}]
  %s2 = inlined_call_operand.vmem [shape: f32[8,4096], index: 2, kind: output, shape index: {}]
  %s3 = sld [smem:[#allocation0]]
  $region18: #{_matrix_scalar_mul_impl.1} parent=0
    _
  %s5 = ssub.s32 1, %s3
  %s6 = scalar_select 0, %s5, %s3
  %7 = sst [smem:[#allocation2]] %s0
  // Predicated region
  $region2: #{_matrix_scalar_mul_impl.1} parent=0 // pred_check
    _
  $region3: #{_matrix_scalar_mul_impl.1} parent=0 // pred_check_branch
    %9 = sbr.rel (0) target = $region5
  $region4: #{_matrix_scalar_mul_impl.1} parent=0 // pred_region
    _
  $region5: #{_matrix_scalar_mul_impl.1} parent=0 // pred_fallthru
    _
  // Predicated region
  $region6: #{_matrix_scalar_mul_impl.1} parent=0 // pred_check
    _
  $region7: #{_matrix_scalar_mul_impl.1} parent=0 // pred_check_branch
    %11 = sbr.rel (0) target = $region9
  $region8: #{_matrix_scalar_mul_impl.1} parent=0 // pred_region
    _
  $region9: #{_matrix_scalar_mul_impl.1} parent=0 // pred_fallthru
    _
  %v12 = vld [vmem:[%s1] sm:$0xff]
  %v13 = vld [vmem:[%s1 + $0x8] sm:$0xff]
  %v14 = vld [vmem:[%s1 + $0x10] sm:$0xff]
  %v15 = vld [vmem:[%s1 + $0x18] sm:$0xff]
  %v16 = vld [vmem:[%s1 + $0x20] sm:$0xff]
  %v17 = vld [vmem:[%s1 + $0x28] sm:$0xff]
  %v18 = vld [vmem:[%s1 + $0x30] sm:$0xff]
  %v19 = vld [vmem:[%s1 + $0x38] sm:$0xff]
  %v20 = vld [vmem:[%s1 + $0x40] sm:$0xff]
  %v21 = vld [vmem:[%s1 + $0x48] sm:$0xff]
  %v22 = vld [vmem:[%s1 + $0x50] sm:$0xff]
  %v23 = vld [vmem:[%s1 + $0x58] sm:$0xff]
  %v24 = vld [vmem:[%s1 + $0x60] sm:$0xff]
  %v25 = vld [vmem:[%s1 + $0x68] sm:$0xff]
  %v26 = vld [vmem:[%s1 + $0x70] sm:$0xff]
  %v27 = vld [vmem:[%s1 + $0x78] sm:$0xff]
  %v28 = vld [vmem:[%s1 + $0x80] sm:$0xff]
  %v29 = vld [vmem:[%s1 + $0x88] sm:$0xff]
  %v30 = vld [vmem:[%s1 + $0x90] sm:$0xff]
  %v31 = vld [vmem:[%s1 + $0x98] sm:$0xff]
  %v32 = vld [vmem:[%s1 + $0xa0] sm:$0xff]
  %v33 = vld [vmem:[%s1 + $0xa8] sm:$0xff]
  %v34 = vld [vmem:[%s1 + $0xb0] sm:$0xff]
  %v35 = vld [vmem:[%s1 + $0xb8] sm:$0xff]
  %v36 = vld [vmem:[%s1 + $0xc0] sm:$0xff]
  %v37 = vld [vmem:[%s1 + $0xc8] sm:$0xff]
  %v38 = vld [vmem:[%s1 + $0xd0] sm:$0xff]
  %v39 = vld [vmem:[%s1 + $0xd8] sm:$0xff]
  %v40 = vld [vmem:[%s1 + $0xe0] sm:$0xff]
  %v41 = vld [vmem:[%s1 + $0xe8] sm:$0xff]
  %v42 = vld [vmem:[%s1 + $0xf0] sm:$0xff]
  %v43 = vld [vmem:[%s1 + $0xf8] sm:$0xff]
  %s44 = sld [smem:[#allocation2]]
  %v45 = vstv %s44
  %v46 = vmul.f32 %v12, %v45
  %v47 = vmul.f32 %v13, %v45
  %v48 = vmul.f32 %v14, %v45
  %v49 = vmul.f32 %v15, %v45
  %v50 = vmul.f32 %v16, %v45
  %v51 = vmul.f32 %v17, %v45
  %v52 = vmul.f32 %v18, %v45
  %v53 = vmul.f32 %v19, %v45
  %v54 = vmul.f32 %v20, %v45
  %v55 = vmul.f32 %v21, %v45
  %v56 = vmul.f32 %v22, %v45
  %v57 = vmul.f32 %v23, %v45
  %v58 = vmul.f32 %v24, %v45
  %v59 = vmul.f32 %v25, %v45
  %v60 = vmul.f32 %v26, %v45
  %v61 = vmul.f32 %v27, %v45
  %v62 = vmul.f32 %v28, %v45
  %v63 = vmul.f32 %v29, %v45
  %v64 = vmul.f32 %v30, %v45
  %v65 = vmul.f32 %v31, %v45
  %v66 = vmul.f32 %v32, %v45
  %v67 = vmul.f32 %v33, %v45
  %v68 = vmul.f32 %v34, %v45
  %v69 = vmul.f32 %v35, %v45
  %v70 = vmul.f32 %v36, %v45
  %v71 = vmul.f32 %v37, %v45
  %v72 = vmul.f32 %v38, %v45
  %v73 = vmul.f32 %v39, %v45
  %v74 = vmul.f32 %v40, %v45
  %v75 = vmul.f32 %v41, %v45
  %v76 = vmul.f32 %v42, %v45
  %v77 = vmul.f32 %v43, %v45
  %78 = vst [vmem:[%s2] sm:$0xff] %v46
  %79 = vst [vmem:[%s2 + $0x8] sm:$0xff] %v47
  %80 = vst [vmem:[%s2 + $0x10] sm:$0xff] %v48
  %81 = vst [vmem:[%s2 + $0x18] sm:$0xff] %v49
  %82 = vst [vmem:[%s2 + $0x20] sm:$0xff] %v50
  %83 = vst [vmem:[%s2 + $0x28] sm:$0xff] %v51
  %84 = vst [vmem:[%s2 + $0x30] sm:$0xff] %v52
  %85 = vst [vmem:[%s2 + $0x38] sm:$0xff] %v53
  %86 = vst [vmem:[%s2 + $0x40] sm:$0xff] %v54
  %87 = vst [vmem:[%s2 + $0x48] sm:$0xff] %v55
  %88 = vst [vmem:[%s2 + $0x50] sm:$0xff] %v56
  %89 = vst [vmem:[%s2 + $0x58] sm:$0xff] %v57
  %90 = vst [vmem:[%s2 + $0x60] sm:$0xff] %v58
  %91 = vst [vmem:[%s2 + $0x68] sm:$0xff] %v59
  %92 = vst [vmem:[%s2 + $0x70] sm:$0xff] %v60
  %93 = vst [vmem:[%s2 + $0x78] sm:$0xff] %v61
  %94 = vst [vmem:[%s2 + $0x80] sm:$0xff] %v62
  %95 = vst [vmem:[%s2 + $0x88] sm:$0xff] %v63
  %96 = vst [vmem:[%s2 + $0x90] sm:$0xff] %v64
  %97 = vst [vmem:[%s2 + $0x98] sm:$0xff] %v65
  %98 = vst [vmem:[%s2 + $0xa0] sm:$0xff] %v66
  %99 = vst [vmem:[%s2 + $0xa8] sm:$0xff] %v67
  %100 = vst [vmem:[%s2 + $0xb0] sm:$0xff] %v68
  %101 = vst [vmem:[%s2 + $0xb8] sm:$0xff] %v69
  %102 = vst [vmem:[%s2 + $0xc0] sm:$0xff] %v70
  %103 = vst [vmem:[%s2 + $0xc8] sm:$0xff] %v71
  %104 = vst [vmem:[%s2 + $0xd0] sm:$0xff] %v72
  %105 = vst [vmem:[%s2 + $0xd8] sm:$0xff] %v73
  %106 = vst [vmem:[%s2 + $0xe0] sm:$0xff] %v74
  %107 = vst [vmem:[%s2 + $0xe8] sm:$0xff] %v75
  %108 = vst [vmem:[%s2 + $0xf0] sm:$0xff] %v76
  %109 = vst [vmem:[%s2 + $0xf8] sm:$0xff] %v77
  // Predicated region
  $region10: #{_matrix_scalar_mul_impl.1} parent=0 // pred_check
    _
  $region11: #{_matrix_scalar_mul_impl.1} parent=0 // pred_check_branch
    %111 = sbr.rel (0) target = $region13
  $region12: #{_matrix_scalar_mul_impl.1} parent=0 // pred_region
    _
  $region13: #{_matrix_scalar_mul_impl.1} parent=0 // pred_fallthru
    _
  // Predicated region
  $region14: #{_matrix_scalar_mul_impl.1} parent=0 // pred_check
    _
  $region15: #{_matrix_scalar_mul_impl.1} parent=0 // pred_check_branch
    %113 = sbr.rel (0) target = $region17
  $region16: #{_matrix_scalar_mul_impl.1} parent=0 // pred_region
    _
  $region17: #{_matrix_scalar_mul_impl.1} parent=0 // pred_fallthru
    _

</llo_original>
